<compile_context>
chip_gen: v7x
topology: tpu7x:2x2x1
jax: 0.10.0
libtpu: 0.0.40
codegen_flags: <defaults>
</compile_context>

<pallas_src>
import jax
import jax.numpy as jnp
from jax.experimental import pallas as pl
from jax.experimental.pallas import tpu as pltpu

EPS = 1e-9
_LANE = 128
_SUB = 8


def _round_up(x, m):
    return (x + m - 1) // m * m


def _int_pow(x, n):
    """x ** n for a static Python int n >= 0 via repeated squaring (VPU only)."""
    if n == 0:
        return jnp.ones_like(x)
    result = None
    base = x
    while n:
        if n & 1:
            result = base if result is None else result * base
        n >>= 1
        if n:
            base = base * base
    return result


def _make_focal_kernel(*, gamma, TB, TR, bs, r_raw, single_log,
                       ragged_batch, ragged_rows):
    """Kernel producing per-(row-tile, batch-tile) (1,128) partial sums of the
    two unscaled focal terms (alpha scaling / means happen in the wrapper)."""

    def kernel(preds_ref, codes_ref, outp_ref, outn_ref):
        j = pl.program_id(0)     # row-tile index (outer grid axis)
        i = pl.program_id(1)     # batch-tile index (inner grid axis)

        # Decode the combined int8 mask codes once per tile (amortized over TB).
        # code = gt + 2*neg  -> gt positions are odd, neg positions are >= 2.
        code = codes_ref[...].astype(jnp.int32)                  # (TR, 128)
        gt_b = jnp.logical_or(code == 1, code == 3)
        gt_f = gt_b.astype(jnp.float32)
        neg_f = (code >= 2).astype(jnp.float32)

        def row_validity(x):
            # Kill rows past the real preds extent (OOB garbage may be NaN, so
            # a select - not a multiply - is required).
            rows = jax.lax.broadcasted_iota(jnp.int32, (TR, _LANE), 0) + j * TR
            return jnp.where(rows < r_raw, x, 0.0)

        if single_log:
            # gt and ~pad are disjoint: one log / one pow chain per element.
            def body(b, acc):
                p = preds_ref[b].astype(jnp.float32)              # (TR, 128)
                x = jnp.where(gt_b, p, 1.0 - p)
                t = _int_pow(1.0 - x, gamma) * jnp.log(x + EPS)
                if ragged_batch:
                    t = jnp.where(i * TB + b < bs, t, 0.0)        # kill OOB batch rows
                return acc + t

            t_sum = jax.lax.fori_loop(0, TB, body,
                                      jnp.zeros((TR, _LANE), jnp.float32))
            if ragged_rows:
                t_sum = row_validity(t_sum)
            tp = jnp.sum(t_sum * gt_f, axis=0, keepdims=True)     # (1, 128)
            tn = jnp.sum(t_sum * neg_f, axis=0, keepdims=True)
        else:
            # Exact two-term form (masks may overlap or are traced).
            def body(b, accs):
                acc_p, acc_n = accs
                p = preds_ref[b].astype(jnp.float32)
                one_m_p = 1.0 - p
                term_p = _int_pow(one_m_p, gamma) * jnp.log(p + EPS)
                term_n = _int_pow(p, gamma) * jnp.log(one_m_p + EPS)
                if ragged_batch:
                    valid = i * TB + b < bs
                    term_p = jnp.where(valid, term_p, 0.0)
                    term_n = jnp.where(valid, term_n, 0.0)
                return acc_p + term_p, acc_n + term_n

            zeros = jnp.zeros((TR, _LANE), jnp.float32)
            tp_sum, tn_sum = jax.lax.fori_loop(0, TB, body, (zeros, zeros))
            if ragged_rows:
                tp_sum = row_validity(tp_sum)
                tn_sum = row_validity(tn_sum)
            tp = jnp.sum(tp_sum * gt_f, axis=0, keepdims=True)
            tn = jnp.sum(tn_sum * neg_f, axis=0, keepdims=True)

        outp_ref[...] = tp.reshape(1, 1, 1, _LANE)
        outn_ref[...] = tn.reshape(1, 1, 1, _LANE)

    return kernel


def focal_loss_pallas(preds, gt_mask, pad_mask_with_gt,
                      alpha=0.55, gamma=8, size_average=True,
                      block_bytes=4 << 20, max_batch_tile=8,
                      vmem_limit_bytes=32 << 20):
    """Pallas implementation of FocalLoss.forward.

    preds:            [bs, N, N] float (any float dtype; f32 math inside)
    gt_mask:          [N, N] bool
    pad_mask_with_gt: [N, N] bool
    returns: (400 * loss_np, loss_p)  -- two float32 scalars
    """
    bs, N, N2 = preds.shape
    assert N == N2, "preds must be [bs, N, N]"
    if int(gamma) != gamma:
        raise ValueError("gamma must be an integer (keeps the pow on the VPU)")
    gamma = int(gamma)

    L = N * N
    itemsize = jnp.dtype(preds.dtype).itemsize

    gt_flat = gt_mask.reshape(-1).astype(bool)
    neg_flat = jnp.logical_not(pad_mask_with_gt.reshape(-1).astype(bool))

    # Single-log fast path is valid iff gt_mask is a subset of pad_mask_with_gt
    # (the module's documented contract).  Verify on concrete masks; fall back
    # to the exact two-log form when traced or when the masks actually overlap.
    try:
        single_log = not bool(jnp.any(jnp.logical_and(gt_flat, neg_flat)))
    except (jax.errors.ConcretizationTypeError, TypeError):
        single_log = False

    # ---- lane-dense view of preds (no copy when L is already 128-aligned) ----
    r_needed = pl.cdiv(L, _LANE)
    r_raw = max(r_needed, _SUB)            # >= 8 rows so row tiles can be 8-aligned
    if r_raw * _LANE == L:
        preds_rows = preds.reshape(bs, r_raw, _LANE)            # free reshape, no copy
    else:
        # Only for 128-misaligned or tiny L: one small pad (zeros are safe:
        # masks are zero there and log(0 + EPS) stays finite).
        preds_rows = jnp.pad(
            preds.reshape(bs, L), ((0, 0), (0, r_raw * _LANE - L))
        ).reshape(bs, r_raw, _LANE)

    # ---- tiling ---------------------------------------------------------------
    TB = max(1, min(bs, max_batch_tile))
    nb = pl.cdiv(bs, TB)
    ragged_batch = (bs % TB) != 0          # last batch tile overhangs preds

    tr_budget = max(_SUB, (block_bytes // (TB * _LANE * itemsize)) // _SUB * _SUB)
    if tr_budget >= r_raw:
        TR, nr = r_raw, 1                  # single full-extent row tile
    else:
        nr0 = pl.cdiv(r_raw, tr_budget)
        TR = _round_up(pl.cdiv(r_raw, nr0), _SUB)   # <= tr_budget, multiple of 8
        nr = pl.cdiv(r_raw, TR)
    ragged_rows = (nr * TR) != r_raw       # last row tile overhangs preds rows

    # ---- combined int8 mask codes (bit0 = gt, bit1 = ~pad); tiny array --------
    r_codes = nr * TR
    codes = gt_flat.astype(jnp.int8) + 2 * neg_flat.astype(jnp.int8)
    codes = jnp.pad(codes, (0, r_codes * _LANE - L)).reshape(r_codes, _LANE)

    kernel = _make_focal_kernel(
        gamma=gamma, TB=TB, TR=TR, bs=bs, r_raw=r_raw, single_log=single_log,
        ragged_batch=ragged_batch, ragged_rows=ragged_rows)

    raw_p, raw_n = pl.pallas_call(
        kernel,
        out_shape=(jax.ShapeDtypeStruct((nr, nb, 1, _LANE), jnp.float32),
                   jax.ShapeDtypeStruct((nr, nb, 1, _LANE), jnp.float32)),
        grid_spec=pltpu.PrefetchScalarGridSpec(
            num_scalar_prefetch=0,
            # Rows outer / batch inner: the mask block index is constant across
            # the inner batch steps, so each mask tile is fetched only once.
            grid=(nr, nb),
            in_specs=[
                pl.BlockSpec((TB, TR, _LANE), lambda j, i: (i, j, 0)),
                pl.BlockSpec((TR, _LANE), lambda j, i: (j, 0)),
            ],
            out_specs=(
                pl.BlockSpec((1, 1, 1, _LANE), lambda j, i: (j, i, 0, 0)),
                pl.BlockSpec((1, 1, 1, _LANE), lambda j, i: (j, i, 0, 0)),
            ),
        ),
        compiler_params=pltpu.CompilerParams(
            # Per-(j, i) partial outputs -> no carried state, so both axes can
            # shard across TensorCores (v7x megacore) even when nb == 1.
            dimension_semantics=("parallel", "parallel"),
            # 32 MiB is safe on every generation (v5e scoped default is 16 MiB,
            # v7x physical VMEM is 64 MiB).  On v6e this (and block_bytes) can
            # be raised; do NOT carry a larger setting back to v7x.
            vmem_limit_bytes=vmem_limit_bytes,
        ),
    )(preds_rows, codes)

    # Tiny final reductions / scaling in plain JAX.
    sum_p = -alpha * jnp.sum(raw_p)
    sum_n = -(1.0 - alpha) * jnp.sum(raw_n)

    # Element counts of the masked gathers (mask broadcast over batch).
    count_p = bs * jnp.sum(gt_flat.astype(jnp.float32))
    count_n = bs * jnp.sum(neg_flat.astype(jnp.float32))

    if size_average:
        loss_np = (sum_p + sum_n) / (count_p + count_n)
        loss_p = sum_p / count_p
    else:
        loss_np = sum_p + sum_n
        loss_p = sum_p
    return 400.0 * loss_np, loss_p


def focal_loss_ref(preds, gt_mask, pad_mask_with_gt,
                   alpha=0.55, gamma=8, size_average=True):
    """Pure-JAX reference mirroring the PyTorch module."""
    bs = preds.shape[0]
    p = preds.astype(jnp.float32)
    gt_f = gt_mask.astype(jnp.float32)
    neg_f = jnp.logical_not(pad_mask_with_gt).astype(jnp.float32)
    term_p = -alpha * (1.0 - p) ** gamma * jnp.log(p + EPS)
    term_n = -(1.0 - alpha) * p ** gamma * jnp.log(1.0 - p + EPS)
    sum_p = jnp.sum(term_p * gt_f[None])
    sum_n = jnp.sum(term_n * neg_f[None])
    count_p = bs * jnp.sum(gt_f)
    count_n = bs * jnp.sum(neg_f)
    if size_average:
        loss_np = (sum_p + sum_n) / (count_p + count_n)
        loss_p = sum_p / count_p
    else:
        loss_np = sum_p + sum_n
        loss_p = sum_p
    return 400.0 * loss_np, loss_p


if __name__ == "__main__":
    key = jax.random.PRNGKey(0)

    def check(bs, N, *, superset_pad, dtype=jnp.float32, **kw):
        k1, k2 = jax.random.split(jax.random.fold_in(key, bs * 1000 + N))
        preds = jax.random.uniform(k1, (bs, N, N), dtype=jnp.float32,
                                   minval=0.01, maxval=0.99).astype(dtype)
        gt_mask = jnp.eye(N, dtype=bool)
        rand = jax.random.bernoulli(k2, 0.3, (N, N))
        pad_mask_with_gt = jnp.logical_or(gt_mask, rand) if superset_pad else rand

        got = focal_loss_pallas(preds, gt_mask, pad_mask_with_gt, **kw)
        jax.block_until_ready(got)
        want = focal_loss_ref(preds.astype(jnp.float32), gt_mask, pad_mask_with_gt)
        for g, w in zip(got, want):
            assert jnp.allclose(g, w, rtol=2e-4, atol=1e-5), (bs, N, str(dtype), g, w)

    # Main case: small [2, 16, 16], gt subset of pad -> single-log fast path.
    check(2, 16, superset_pad=True)
    # Overlapping masks + 128-misaligned L -> exact two-log fallback, lane-pad path.
    check(3, 20, superset_pad=False)
    # 128-aligned L with a non-multiple-of-8 row extent -> full-extent row tile,
    # no wrapper copy of preds.
    check(2, 48, superset_pad=True)
    # Stress the ragged paths: no-copy reshape, ragged batch (bs=9, TB=8),
    # multiple ragged row tiles, bf16 on the wire.
    check(9, 48, superset_pad=True, dtype=jnp.bfloat16,
          block_bytes=8 * 128 * 2 * 8)

    print("KERNEL_OK")
</pallas_src>

<mosaic_0001>
module attributes {stable_mosaic.version = 11 : i64} {
  func.func @kernel(%arg0: i32, %arg1: i32, %arg2: memref<2x8x128xf32, #tpu.memory_space<vmem>>, %arg3: memref<8x128xi8, #tpu.memory_space<vmem>>, %arg4: memref<1x1x1x128xf32, #tpu.memory_space<vmem>>, %arg5: memref<1x1x1x128xf32, #tpu.memory_space<vmem>>) attributes {dimension_semantics = [#tpu.dimension_semantics<parallel>, #tpu.dimension_semantics<parallel>], iteration_bounds = array<i64: 1, 1>, scalar_prefetch = 0 : i64, scratch_operands = 0 : i64, tpu.core_type = #tpu.core_type<tc>, window_params = [{transform_indices = @transform_0, window_bounds = array<i64: 2, 8, 128>}, {transform_indices = @transform_1, window_bounds = array<i64: 8, 128>}, {transform_indices = @transform_2, window_bounds = array<i64: 1, 1, 1, 128>}, {transform_indices = @transform_3, window_bounds = array<i64: 1, 1, 1, 128>}]} {
    %c0 = arith.constant 0 : index
    %c0_0 = arith.constant 0 : index
    %0 = vector.load %arg3[%c0, %c0_0] : memref<8x128xi8, #tpu.memory_space<vmem>>, vector<8x128xi8>
    %1 = arith.extsi %0 : vector<8x128xi8> to vector<8x128xi32>
    %c1_i32 = arith.constant 1 : i32
    %2 = vector.broadcast %c1_i32 : i32 to vector<8x128xi32>
    %3 = arith.cmpi eq, %1, %2 : vector<8x128xi32>
    %c3_i32 = arith.constant 3 : i32
    %4 = vector.broadcast %c3_i32 : i32 to vector<8x128xi32>
    %5 = arith.cmpi eq, %1, %4 : vector<8x128xi32>
    %6 = arith.ori %3, %5 : vector<8x128xi1>
    %7 = arith.extui %6 : vector<8x128xi1> to vector<8x128xi32>
    %8 = arith.sitofp %7 : vector<8x128xi32> to vector<8x128xf32>
    %c2_i32 = arith.constant 2 : i32
    %9 = vector.broadcast %c2_i32 : i32 to vector<8x128xi32>
    %10 = arith.cmpi sge, %1, %9 : vector<8x128xi32>
    %11 = arith.extui %10 : vector<8x128xi1> to vector<8x128xi32>
    %12 = arith.sitofp %11 : vector<8x128xi32> to vector<8x128xf32>
    %cst = arith.constant 0.000000e+00 : f32
    %13 = vector.broadcast %cst : f32 to vector<8x128xf32>
    %c0_i32 = arith.constant 0 : i32
    %c2_i32_1 = arith.constant 2 : i32
    %14 = arith.addi %c0_i32, %c2_i32_1 : i32
    %c1_i32_2 = arith.constant 1 : i32
    %15 = scf.for %arg6 = %c0_i32 to %14 step %c1_i32_2 iter_args(%arg7 = %13) -> (vector<8x128xf32>)  : i32 {
      %26 = arith.index_cast %arg6 : i32 to index
      %c0_14 = arith.constant 0 : index
      %c0_15 = arith.constant 0 : index
      %27 = vector.load %arg2[%26, %c0_14, %c0_15] : memref<2x8x128xf32, #tpu.memory_space<vmem>>, vector<1x8x128xf32>
      %28 = vector.shape_cast %27 : vector<1x8x128xf32> to vector<8x128xf32>
      %cst_16 = arith.constant 1.000000e+00 : f32
      %29 = vector.broadcast %cst_16 : f32 to vector<8x128xf32>
      %30 = arith.subf %29, %28 : vector<8x128xf32>
      %31 = arith.select %6, %28, %30 : vector<8x128xi1>, vector<8x128xf32>
      %cst_17 = arith.constant 1.000000e+00 : f32
      %32 = vector.broadcast %cst_17 : f32 to vector<8x128xf32>
      %33 = arith.subf %32, %31 : vector<8x128xf32>
      %34 = arith.mulf %33, %33 : vector<8x128xf32>
      %35 = arith.mulf %34, %34 : vector<8x128xf32>
      %36 = arith.mulf %35, %35 : vector<8x128xf32>
      %cst_18 = arith.constant 9.99999971E-10 : f32
      %37 = vector.broadcast %cst_18 : f32 to vector<8x128xf32>
      %38 = arith.addf %31, %37 : vector<8x128xf32>
      %39 = math.log %38 : vector<8x128xf32>
      %40 = arith.mulf %36, %39 : vector<8x128xf32>
      %41 = arith.addf %arg7, %40 : vector<8x128xf32>
      scf.yield %41 : vector<8x128xf32>
    }
    %c2_i32_3 = arith.constant 2 : i32
    %16 = arith.mulf %15, %8 : vector<8x128xf32>
    %cst_4 = arith.constant dense<0.000000e+00> : vector<128xf32>
    %17 = vector.multi_reduction <add>, %16, %cst_4 [0] : vector<8x128xf32> to vector<128xf32>
    %18 = vector.shape_cast %17 : vector<128xf32> to vector<1x128xf32>
    %19 = arith.mulf %15, %12 : vector<8x128xf32>
    %cst_5 = arith.constant dense<0.000000e+00> : vector<128xf32>
    %20 = vector.multi_reduction <add>, %19, %cst_5 [0] : vector<8x128xf32> to vector<128xf32>
    %21 = vector.shape_cast %20 : vector<128xf32> to vector<1x128xf32>
    %22 = vector.shape_cast %18 : vector<1x128xf32> to vector<1x1x1x128xf32>
    %c0_6 = arith.constant 0 : index
    %c0_7 = arith.constant 0 : index
    %c0_8 = arith.constant 0 : index
    %c0_9 = arith.constant 0 : index
    %23 = vector.load %arg4[%c0_6, %c0_7, %c0_8, %c0_9] : memref<1x1x1x128xf32, #tpu.memory_space<vmem>>, vector<1x1x1x128xf32>
    tpu.vector_store %arg4[%c0_6, %c0_7, %c0_8, %c0_9], %22 {strides = array<i32>} : memref<1x1x1x128xf32, #tpu.memory_space<vmem>>, vector<1x1x1x128xf32>,
    %24 = vector.shape_cast %21 : vector<1x128xf32> to vector<1x1x1x128xf32>
    %c0_10 = arith.constant 0 : index
    %c0_11 = arith.constant 0 : index
    %c0_12 = arith.constant 0 : index
    %c0_13 = arith.constant 0 : index
    %25 = vector.load %arg5[%c0_10, %c0_11, %c0_12, %c0_13] : memref<1x1x1x128xf32, #tpu.memory_space<vmem>>, vector<1x1x1x128xf32>
    tpu.vector_store %arg5[%c0_10, %c0_11, %c0_12, %c0_13], %24 {strides = array<i32>} : memref<1x1x1x128xf32, #tpu.memory_space<vmem>>, vector<1x1x1x128xf32>,
    return
  }
  func.func @transform_0(%arg0: i32, %arg1: i32) -> (i32, i32, i32) {
    %c0_i32 = arith.constant 0 : i32
    %c0_i32_0 = arith.constant 0 : i32
    return %arg1, %arg0, %c0_i32 : i32, i32, i32
  }
  func.func @transform_1(%arg0: i32, %arg1: i32) -> (i32, i32) {
    %c0_i32 = arith.constant 0 : i32
    %c0_i32_0 = arith.constant 0 : i32
    return %arg0, %c0_i32 : i32, i32
  }
  func.func @transform_2(%arg0: i32, %arg1: i32) -> (i32, i32, i32, i32) {
    %c0_i32 = arith.constant 0 : i32
    %c0_i32_0 = arith.constant 0 : i32
    %c0_i32_1 = arith.constant 0 : i32
    return %arg0, %arg1, %c0_i32, %c0_i32_0 : i32, i32, i32, i32
  }
  func.func @transform_3(%arg0: i32, %arg1: i32) -> (i32, i32, i32, i32) {
    %c0_i32 = arith.constant 0 : i32
    %c0_i32_0 = arith.constant 0 : i32
    %c0_i32_1 = arith.constant 0 : i32
    return %arg0, %arg1, %c0_i32, %c0_i32_0 : i32, i32, i32, i32
  }
}

</mosaic_0001>

<llo_original>
// kernel: tpu_custom_call.1
$region0: #{tpu_custom_call.1}
  #allocation0 [shape = 'u32[]', space=smem, size = 0x4, offset = 0x4, fixed_abs, tag = 'smem constant byte address 0x4 - core index']
  #allocation1 [shape = 'u32[144,128]{1,0:T(1,128)}', space=vmem, size = 0x12000, scoped, tag = 'internal scratch']
  %s0 = inlined_call_operand.hbm [shape: f32[2,8,128], index: 0, kind: input, shape index: {}]
  %s1 = inlined_call_operand.vmem [shape: s8[8,128], index: 1, kind: input, shape index: {}]
  %s2 = inlined_call_operand.hbm [shape: f32[1,1,1,128], index: 2, kind: output, shape index: {0}]
  %s3 = inlined_call_operand.hbm [shape: f32[1,1,1,128], index: 3, kind: output, shape index: {1}]
  %4 = xla_tuple %s2, %s3
  %s5 = sld [smem:[#allocation0]]
  $region37: #{tpu_custom_call.1} parent=0
    _
  %s7 = ssub.s32 1, %s5
  %s8 = scalar_select 0, %s7, %s5
  $region1: #{tpu_custom_call.1} parent=0
    #allocation2 [shape = 'u8[8192]{0}', space=vmem, size = 0x2000, scoped, tag = 'input window, operand 0, single buffered']
    #allocation3 [shape = 's32[1]{0}', space=sflag, size = 0x4, scoped, tag = 'scoped memory for tpu_custom_call.1']
    #allocation4 [shape = 's32[1]{0}', space=sflag, size = 0x4, scoped, tag = 'scoped memory for tpu_custom_call.1']
    #allocation5 [shape = 'u8[512]{0}', space=vmem, size = 0x400, scoped, tag = 'output window, operand 0, single buffered']
    #allocation6 [shape = 'u8[512]{0}', space=vmem, size = 0x400, scoped, tag = 'output window, operand 1, single buffered']
    #allocation7 [shape = 's32[1]{0}', space=sflag, size = 0x4, scoped, tag = 'scoped memory for tpu_custom_call.1']
    %9 = vsyncpa [#allocation3], 0
    %10 = vsyncpa [#allocation4], 0
    %11 = vsyncpa [#allocation7], 0
    // Predicated region
    $region2: #{tpu_custom_call.1} parent=1 // pred_check
      _
    $region3: #{tpu_custom_call.1} parent=1 // pred_check_branch
      %13 = sbr.rel (0) target = $region5
    $region4: #{tpu_custom_call.1} parent=1 // pred_region
      %s15 = ssub.s32 256, 256
      %16 = vsyncadd [#allocation3], %s15
      %s17 = sshll.u32 [#allocation2], 4
      %s18 = int_to_ptr.vmem [resolvable:$true] %s17
      %23 = dma.hbm_to_vmem [thread:$0]  %s0, 256, %s18, [#allocation3], 128, 128, 8
    $region5: #{tpu_custom_call.1} parent=1 // pred_fallthru
      _
    // Predicated region
    $region6: #{tpu_custom_call.1} parent=1 // pred_check
      _
    $region7: #{tpu_custom_call.1} parent=1 // pred_check_branch
      %25 = sbr.rel (0) target = $region9
    $region8: #{tpu_custom_call.1} parent=1 // pred_region
      _
    $region9: #{tpu_custom_call.1} parent=1 // pred_fallthru
      _
    // Predicated region
    $region10: #{tpu_custom_call.1} parent=1 // pred_check
      _
    $region11: #{tpu_custom_call.1} parent=1 // pred_check_branch
      %27 = sbr.rel (0) target = $region13
    $region12: #{tpu_custom_call.1} parent=1 // pred_region
      %28 = dma.done [#allocation3], 256
    $region13: #{tpu_custom_call.1} parent=1 // pred_fallthru
      _
    %v29 = vld [vmem:[%s1] sm:$0x3]
    %v30 = vunpack.c.0.s8 %v29
    %vm31 = vcmp.eq.s32.totalorder %v30, 1
    %vm32 = vcmp.eq.s32.totalorder %v30, 3
    %vm33 = vmor %vm31, %vm32
    %v34 = vsel %vm33, 1, 0
    %v35 = vcvt.s32.f32 %v34
    %vm36 = vcmp.ge.s32.totalorder %v30, 2
    %v37 = vsel %vm36, 1, 0
    %v38 = vcvt.s32.f32 %v37
    loop: start=0, step=1, limit=2
    $region14: #{tpu_custom_call.1} parent=1 // loop_pre_header
      _
    $region15: #{tpu_custom_call.1} parent=1 // loop_header
      %s40 = sphi 0, %s44
      %p41 = scmp.ge.s32.totalorder %s40, 2
      %v45 = vphi 0.0, %v59
    $region16: #{tpu_custom_call.1} parent=1 // loop_header_branch
      %43 = sbr.rel (%p41) target = $region20
    $region17: #{tpu_custom_call.1} parent=1 // loop_body
      %s46 = smul.u32 %s40, 8
      %s47 = scalar_lea.vmem [#allocation2], %s46
      %v48 = vld [vmem:[%s47] sm:$0xff]
      %v49 = vsub.f32 1.0, %v48
      %v50 = vsel %vm33, %v48, %v49
      %v51 = vsub.f32 1.0, %v50
      %v52 = vmul.f32 %v51, %v51
      %v53 = vmul.f32 %v52, %v52
      %v54 = vmul.f32 %v53, %v53
      %v55 = vadd.f32 %v50, 1e-09
      %v56 = vlog2.pop %v55
      %v57 = vmul.f32 %v56, 0.6931472
      %v58 = vmul.f32 %v54, %v57
      %v59 = vadd.f32 %v45, %v58
    $region18: #{tpu_custom_call.1} parent=1 // loop_footer
      %s44 = sadd.s32 1, %s40
    $region19: #{tpu_custom_call.1} parent=1 // loop_footer_branch
      %39 = sbr.rel target = $region15
    $region20: #{tpu_custom_call.1} parent=1 // loop_exit
      _
    %v60 = vmul.f32 %v45, %v35
    %v61 = vrot.slane %v60, 4
    %v62 = vadd.f32 %v60, %v61
    %v63 = vrot.slane %v62, 2
    %v64 = vadd.f32 %v62, %v63
    %v65 = vrot.slane %v64, 1
    %v66 = vadd.f32 %v64, %v65
    %v67 = vmul.f32 %v45, %v38
    %v68 = vrot.slane %v67, 4
    %v69 = vadd.f32 %v67, %v68
    %v70 = vrot.slane %v69, 2
    %v71 = vadd.f32 %v69, %v70
    %v72 = vrot.slane %v71, 1
    %v73 = vadd.f32 %v71, %v72
    %74 = vst [vmem:[#allocation5] sm:$0x1] %v66
    %75 = vst [vmem:[#allocation6] sm:$0x1] %v73
    // Predicated region
    $region21: #{tpu_custom_call.1} parent=1 // pred_check
      _
    $region22: #{tpu_custom_call.1} parent=1 // pred_check_branch
      %77 = sbr.rel (0) target = $region24
    $region23: #{tpu_custom_call.1} parent=1 // pred_region
      %s79 = ssub.s32 16, 16
      %80 = vsyncadd [#allocation4], %s79
      %s82 = sshll.u32 [#allocation5], 4
      %s83 = int_to_ptr.vmem [resolvable:$true] %s82
      %85 = dma.vmem_to_hbm [thread:$0]  %s83, 16, %s2, [#allocation4]
    $region24: #{tpu_custom_call.1} parent=1 // pred_fallthru
      _
    // Predicated region
    $region25: #{tpu_custom_call.1} parent=1 // pred_check
      _
    $region26: #{tpu_custom_call.1} parent=1 // pred_check_branch
      %87 = sbr.rel (0) target = $region28
    $region27: #{tpu_custom_call.1} parent=1 // pred_region
      %s89 = ssub.s32 16, 16
      %90 = vsyncadd [#allocation7], %s89
      %s92 = sshll.u32 [#allocation6], 4
      %s93 = int_to_ptr.vmem [resolvable:$true] %s92
      %95 = dma.vmem_to_hbm [thread:$0]  %s93, 16, %s3, [#allocation7]
    $region28: #{tpu_custom_call.1} parent=1 // pred_fallthru
      _
    // Predicated region
    $region29: #{tpu_custom_call.1} parent=1 // pred_check
      _
    $region30: #{tpu_custom_call.1} parent=1 // pred_check_branch
      %97 = sbr.rel (0) target = $region32
    $region31: #{tpu_custom_call.1} parent=1 // pred_region
      %98 = dma.done [#allocation4], 16
    $region32: #{tpu_custom_call.1} parent=1 // pred_fallthru
      _
    // Predicated region
    $region33: #{tpu_custom_call.1} parent=1 // pred_check
      _
    $region34: #{tpu_custom_call.1} parent=1 // pred_check_branch
      %100 = sbr.rel (0) target = $region36
    $region35: #{tpu_custom_call.1} parent=1 // pred_region
      %101 = dma.done [#allocation7], 16
    $region36: #{tpu_custom_call.1} parent=1 // pred_fallthru
      _
    %102 = vsyncpa [#allocation3], 1
    %103 = vsyncpa [#allocation4], 1
    %104 = vsyncpa [#allocation7], 1

</llo_original>
